<compile_context>
chip_gen: v7x
topology: tpu7x:2x2x1
jax: 0.10.0
libtpu: 0.0.40
codegen_flags: <defaults>
</compile_context>

<pallas_src>
import numpy as np

import jax
import jax.numpy as jnp
from jax.experimental import pallas as pl
from jax.experimental.pallas import tpu as pltpu

ROWS_PER_FIELD = 8                      # sublane dimension of one field tile
LANES = 128                             # lane dimension (vreg width)
MAX_LEN = ROWS_PER_FIELD * LANES        # max codepoints per string field
FUSED_ROWS = 2 * ROWS_PER_FIELD         # rows [0:8] -> id, rows [8:16] -> path
_PAD = -1


# ----------------------------------------------------------------------------
# Pallas kernel (opt-in device path): single fused-tile passthrough.
# One (16, 128) int32 tile = exactly 2 f32-layout vregs; output HBM buffer
# aliases the donated input, so the copy below is the only data movement.
# ----------------------------------------------------------------------------
def _passthrough_kernel(buf_ref, out_ref):
    out_ref[...] = buf_ref[...]


_passthrough = pl.pallas_call(
    _passthrough_kernel,
    out_shape=jax.ShapeDtypeStruct((FUSED_ROWS, LANES), jnp.int32),
    in_specs=[pl.BlockSpec((FUSED_ROWS, LANES), lambda: (0, 0),
                           memory_space=pltpu.VMEM)],
    out_specs=pl.BlockSpec((FUSED_ROWS, LANES), lambda: (0, 0),
                           memory_space=pltpu.VMEM),
    input_output_aliases={0: 0},  # output writes back into the donated input
)


# ----------------------------------------------------------------------------
# Vectorized host-side string <-> int32 buffer glue (numpy utf-32).
# ----------------------------------------------------------------------------
def encode_fields(id_str: str, path_str: str) -> np.ndarray:
    """Pack both string fields into one (16, 128) int32 codepoint buffer."""
    buf = np.full((FUSED_ROWS, LANES), _PAD, dtype=np.int32)
    for row0, s in ((0, id_str), (ROWS_PER_FIELD, path_str)):
        codes = np.frombuffer(s.encode("utf-32-le"), dtype=np.int32)
        if codes.size > MAX_LEN:
            raise ValueError(
                f"string of {codes.size} codepoints exceeds MAX_LEN={MAX_LEN}"
            )
        padded = np.full(MAX_LEN, _PAD, dtype=np.int32)
        padded[: codes.size] = codes
        buf[row0 : row0 + ROWS_PER_FIELD] = padded.reshape(ROWS_PER_FIELD, LANES)
    return buf


def decode_field(buf: np.ndarray, row0: int) -> str:
    flat = np.asarray(buf[row0 : row0 + ROWS_PER_FIELD], dtype=np.int32).reshape(-1)
    codes = flat[flat != _PAD].astype("<u4")
    return codes.tobytes().decode("utf-32-le") if codes.size else ""


# ----------------------------------------------------------------------------
# The transform.
# ----------------------------------------------------------------------------
class AdaptDataFormat:
    """JAX port of the PyTorch AdaptDataFormat transform.

    Default forward is pure host-side dict re-keying (identical semantics to
    the PyTorch module, zero device work).  Set ``device_copy=True`` to route
    the string payload through the fused Pallas passthrough kernel instead.
    """

    def __init__(self, id_key: str = "id", path_key: str = "path",
                 device_copy: bool = False):
        self.id_key = id_key
        self.path_key = path_key
        self.device_copy = device_copy

    def __call__(self, result: dict) -> dict:
        id_val = result[self.id_key]
        path_val = result[self.path_key]

        if not self.device_copy:
            # Fast path: the forward has no tensor math -> no kernel launch,
            # no H2D/D2H transfer, no forced device sync.
            return {"meta": {"id": id_val, "filename": path_val}}

        # TODO(synk): strings have no TPU representation; the opt-in device
        # path encodes them as int32 codepoints, moves ONE fused (16, 128)
        # buffer through the Pallas kernel (output aliases input), decodes.
        fused = _passthrough(jnp.asarray(encode_fields(id_val, path_val)))
        fused = np.asarray(jax.block_until_ready(fused))
        return {
            "meta": {
                "id": decode_field(fused, 0),
                "filename": decode_field(fused, ROWS_PER_FIELD),
            }
        }

    def __repr__(self) -> str:
        return (
            f"{self.__class__.__name__}"
            f"(id_key={self.id_key}, path_key={self.path_key})"
        )


if __name__ == "__main__":
    # No learned parameters exist in this module; PRNGKey kept for convention.
    _ = jax.random.PRNGKey(0)

    sample = {
        "id": "A.Beautiful.Mind.2001__#00-01-45_00-02-50_label_A",
        "path": (
            "https://huggingface.co/datasets/jherng/xd-violence/resolve/main/"
            "data/video/1-1004/A.Beautiful.Mind.2001__%2300-01-45_00-02-50_"
            "label_A.mp4"
        ),
        "binary_target": 0,
        "multilabel_targets": [0],
        "frame_annotations": {"start": [], "end": []},
    }

    # Default forward: pure host re-keying (matches the PyTorch forward).
    host_out = AdaptDataFormat()(sample)
    assert set(host_out.keys()) == {"meta"}
    assert host_out["meta"]["id"] == sample["id"]
    assert host_out["meta"]["filename"] == sample["path"]

    # Opt-in device path: run the fused Pallas passthrough kernel once and
    # block on the result inside the transform.
    dev_out = AdaptDataFormat(device_copy=True)(sample)
    assert dev_out == host_out

    print("KERNEL_OK")
</pallas_src>

<mosaic_0001>
module attributes {stable_mosaic.version = 11 : i64} {
  func.func @_passthrough_kernel(%arg0: memref<16x128xi32, #tpu.memory_space<vmem>>, %arg1: memref<16x128xi32, #tpu.memory_space<vmem>>) attributes {dimension_semantics = [], scalar_prefetch = 0 : i64, scratch_operands = 0 : i64, tpu.core_type = #tpu.core_type<tc>} {
    %c0 = arith.constant 0 : index
    %c0_0 = arith.constant 0 : index
    %0 = vector.load %arg0[%c0, %c0_0] : memref<16x128xi32, #tpu.memory_space<vmem>>, vector<16x128xi32>
    %c0_1 = arith.constant 0 : index
    %c0_2 = arith.constant 0 : index
    %1 = vector.load %arg1[%c0_1, %c0_2] : memref<16x128xi32, #tpu.memory_space<vmem>>, vector<16x128xi32>
    tpu.vector_store %arg1[%c0_1, %c0_2], %0 {strides = array<i32>} : memref<16x128xi32, #tpu.memory_space<vmem>>, vector<16x128xi32>,
    return
  }
}

</mosaic_0001>

<llo_original>
// kernel: tpu_custom_call.1
$region0: #{tpu_custom_call.1}
  #allocation0 [shape = 'u32[]', space=smem, size = 0x4, offset = 0x4, fixed_abs, tag = 'smem constant byte address 0x4 - core index']
  #allocation1 [shape = 'u32[144,128]{1,0:T(1,128)}', space=vmem, size = 0x12000, scoped, tag = 'internal scratch']
  %s0 = inlined_call_operand.hbm [shape: s32[16,128], index: 0, kind: input, shape index: {}, may-alias: {0,1}]
  %s1 = inlined_call_operand.hbm [shape: s32[16,128], index: 1, kind: output, shape index: {}, may-alias: {0,1}]
  %s2 = sld [smem:[#allocation0]]
  $region18: #{tpu_custom_call.1} parent=0
    _
  %s4 = ssub.s32 1, %s2
  %s5 = scalar_select 0, %s4, %s2
  $region1: #{tpu_custom_call.1} parent=0
    #allocation2 [shape = 'u8[8192]{0}', space=vmem, size = 0x2000, scoped, tag = 'input window, operand 0, single buffered']
    #allocation3 [shape = 's32[1]{0}', space=sflag, size = 0x4, scoped, tag = 'scoped memory for tpu_custom_call.1']
    #allocation4 [shape = 's32[1]{0}', space=sflag, size = 0x4, scoped, tag = 'scoped memory for tpu_custom_call.1']
    #allocation5 [shape = 'u8[8192]{0}', space=vmem, size = 0x2000, scoped, tag = 'output window, operand 0, single buffered']
    %6 = vsyncpa [#allocation3], 0
    %7 = vsyncpa [#allocation4], 0
    // Predicated region
    $region2: #{tpu_custom_call.1} parent=1 // pred_check
      _
    $region3: #{tpu_custom_call.1} parent=1 // pred_check_branch
      %9 = sbr.rel (0) target = $region5
    $region4: #{tpu_custom_call.1} parent=1 // pred_region
      %s11 = ssub.s32 256, 256
      %12 = vsyncadd [#allocation3], %s11
      %s13 = sshll.u32 [#allocation2], 4
      %s14 = int_to_ptr.vmem [resolvable:$true] %s13
      %19 = dma.hbm_to_vmem [thread:$0]  %s0, 256, %s14, [#allocation3], 128, 128, 8
    $region5: #{tpu_custom_call.1} parent=1 // pred_fallthru
      _
    // Predicated region
    $region6: #{tpu_custom_call.1} parent=1 // pred_check
      _
    $region7: #{tpu_custom_call.1} parent=1 // pred_check_branch
      %21 = sbr.rel (0) target = $region9
    $region8: #{tpu_custom_call.1} parent=1 // pred_region
      %22 = dma.done [#allocation3], 256
    $region9: #{tpu_custom_call.1} parent=1 // pred_fallthru
      _
    %v23 = vld [vmem:[#allocation2] sm:$0xff]
    %v24 = vld [vmem:[#allocation2 + $0x8] sm:$0xff]
    %25 = vst [vmem:[#allocation5] sm:$0xff] %v23
    %26 = vst [vmem:[#allocation5 + $0x8] sm:$0xff] %v24
    // Predicated region
    $region10: #{tpu_custom_call.1} parent=1 // pred_check
      _
    $region11: #{tpu_custom_call.1} parent=1 // pred_check_branch
      %28 = sbr.rel (0) target = $region13
    $region12: #{tpu_custom_call.1} parent=1 // pred_region
      %s30 = ssub.s32 256, 256
      %31 = vsyncadd [#allocation4], %s30
      %s32 = sshll.u32 [#allocation5], 4
      %s33 = int_to_ptr.vmem [resolvable:$true] %s32
      %38 = dma.vmem_to_hbm [thread:$0]  %s33, 256, %s1, [#allocation4], 128, 128, 8
    $region13: #{tpu_custom_call.1} parent=1 // pred_fallthru
      _
    // Predicated region
    $region14: #{tpu_custom_call.1} parent=1 // pred_check
      _
    $region15: #{tpu_custom_call.1} parent=1 // pred_check_branch
      %40 = sbr.rel (0) target = $region17
    $region16: #{tpu_custom_call.1} parent=1 // pred_region
      %41 = dma.done [#allocation4], 256
    $region17: #{tpu_custom_call.1} parent=1 // pred_fallthru
      _
    %42 = vsyncpa [#allocation3], 1
    %43 = vsyncpa [#allocation4], 1

</llo_original>
